<compile_context>
chip_gen: v5e
topology: v5e:2x2
jax: 0.10.0
libtpu: 0.0.40
codegen_flags: <defaults>
</compile_context>

<pallas_src>
import jax
import jax.numpy as jnp
from jax.experimental import pallas as pl
from jax.experimental.pallas import tpu as pltpu


def _rope_kernel(pos_ref, theta_ref, phase_ref, out_ref):
    # pos_ref:   [TS, 1]    float32  (positions tile)
    # theta_ref: [1, 2*D]   float32  (theta repeated pairwise: t0,t0,t1,t1,...)
    # phase_ref: [1, 2*D]   float32  (0, pi/2, 0, pi/2, ...)
    # out_ref:   [TS, 2*D]
    angles = pos_ref[...] * theta_ref[...] - phase_ref[...]   # [TS, 2D] broadcast
    out_ref[...] = jnp.cos(angles).astype(out_ref.dtype)      # cos(a-pi/2) == sin(a)


def rope_positional_encoding(positions, d_model, base=100, block_rows=None,
                             out_dtype=jnp.float32):
    """positions: 1-D array [S] (int or float). Returns [S, 2*d_model]."""
    positions = jnp.asarray(positions, dtype=jnp.float32)
    assert positions.ndim == 1, "this wrapper handles 1-D position vectors"
    S = positions.shape[0]
    two_d = 2 * d_model

    # theta as defined in __init__ (pairs already repeat due to i // 2),
    # repeated so theta_rep[j] = theta[j // 2] -> length 2*d_model, matching
    # the interleaved (cos, sin) output layout.
    i = jnp.arange(d_model, dtype=jnp.float32)
    theta = jnp.asarray(base, jnp.float32) ** (-2.0 * jnp.floor(i / 2.0) / d_model)
    theta_rep = jnp.repeat(theta, 2).reshape(1, two_d)
    # phase offset: even lanes -> cos (0), odd lanes -> sin (pi/2), since
    # sin(x) = cos(x - pi/2). Lets the kernel use a single cos over the tile.
    phase = jnp.tile(jnp.array([0.0, jnp.pi / 2.0], jnp.float32),
                     d_model).reshape(1, two_d)

    pos2d = positions.reshape(S, 1)

    # --- tile-size selection ------------------------------------------------
    # Keep the double-buffered f32 output tile under ~16 MiB (fits the 32 MiB
    # scoped-VMEM limit on all of v5e/v6e/v7x); rows are a multiple of 8.
    if block_rows is None:
        budget_bytes = 8 * 1024 * 1024
        block_rows = max(8, min(1024, (budget_bytes // (two_d * 4)) // 8 * 8))
    block_rows = int(block_rows)
    if block_rows >= S:
        block_rows = S                      # single block == full dim (always legal)
    else:
        block_rows = max(8, (block_rows // 8) * 8)   # multiple of 8 sublanes

    grid = (pl.cdiv(S, block_rows),)        # partial last block is masked by Pallas

    out = pl.pallas_call(
        _rope_kernel,
        out_shape=jax.ShapeDtypeStruct((S, two_d), out_dtype),
        grid=grid,
        in_specs=[
            pl.BlockSpec((block_rows, 1), lambda i: (i, 0)),
            pl.BlockSpec((1, two_d), lambda i: (0, 0)),
            pl.BlockSpec((1, two_d), lambda i: (0, 0)),
        ],
        out_specs=pl.BlockSpec((block_rows, two_d), lambda i: (i, 0)),
        compiler_params=pltpu.CompilerParams(
            dimension_semantics=("parallel",),          # shard across TCs on v7x
            vmem_limit_bytes=32 * 1024 * 1024,          # explicit, v7x-safe
        ),
    )(pos2d, theta_rep, phase)
    return out


def _reference(positions, d_model, base=100):
    """Pure-JAX reference mirroring the PyTorch forward."""
    positions = jnp.asarray(positions, dtype=jnp.float32)
    i = jnp.arange(d_model, dtype=jnp.float32)
    theta = jnp.asarray(base, jnp.float32) ** (-2.0 * jnp.floor(i / 2.0) / d_model)
    angles = positions[..., None] * theta                              # [..., D]
    sin_cos = jnp.stack([jnp.cos(angles), jnp.sin(angles)], axis=-1)   # [..., D, 2]
    return sin_cos.reshape(*sin_cos.shape[:-2], -1)                    # [..., 2D]


if __name__ == "__main__":
    key = jax.random.PRNGKey(0)

    # Main check: lane-dense output (2*d_model = 128) and a multi-tile grid
    # with a partial last block (200 = 3*64 + 8).
    d_model = 64
    seq = 200
    positions = jnp.arange(seq, dtype=jnp.float32) + jax.random.uniform(key, (seq,))

    out = rope_positional_encoding(positions, d_model, base=100, block_rows=64)
    out = jax.block_until_ready(out)

    ref = _reference(positions, d_model, base=100)
    assert out.shape == (seq, 2 * d_model)
    # f32 range reduction at angles ~200 limits agreement; values are in [-1, 1].
    assert jnp.allclose(out, ref, atol=1e-4, rtol=1e-5), "mismatch vs reference"

    # Secondary check: original small demo shape (single block, 64-lane output).
    d_model2, seq2 = 32, 8
    pos2 = jnp.arange(seq2, dtype=jnp.float32) + jax.random.uniform(key, (seq2,))
    out2 = jax.block_until_ready(rope_positional_encoding(pos2, d_model2, base=100))
    ref2 = _reference(pos2, d_model2, base=100)
    assert out2.shape == (seq2, 2 * d_model2)
    assert jnp.allclose(out2, ref2, atol=1e-5, rtol=1e-5), "mismatch vs reference (small)"

    print("KERNEL_OK")
</pallas_src>

<mosaic_0001>
module attributes {stable_mosaic.version = 11 : i64} {
  func.func @_rope_kernel(%arg0: i32, %arg1: memref<64x1xf32, #tpu.memory_space<vmem>>, %arg2: memref<1x128xf32, #tpu.memory_space<vmem>>, %arg3: memref<1x128xf32, #tpu.memory_space<vmem>>, %arg4: memref<64x128xf32, #tpu.memory_space<vmem>>) attributes {dimension_semantics = [#tpu.dimension_semantics<parallel>], iteration_bounds = array<i64: 4>, scalar_prefetch = 0 : i64, scratch_operands = 0 : i64, tpu.core_type = #tpu.core_type<tc>, window_params = [{transform_indices = @transform_0, window_bounds = array<i64: 64, 1>}, {pipeline_mode = #tpu.pipeline_mode<synchronous>, transform_indices = @transform_1, window_bounds = array<i64: 1, 128>}, {pipeline_mode = #tpu.pipeline_mode<synchronous>, transform_indices = @transform_2, window_bounds = array<i64: 1, 128>}, {transform_indices = @transform_3, window_bounds = array<i64: 64, 128>}]} {
    %c0 = arith.constant 0 : index
    %c0_0 = arith.constant 0 : index
    %0 = vector.load %arg1[%c0, %c0_0] : memref<64x1xf32, #tpu.memory_space<vmem>>, vector<64x1xf32>
    %c0_1 = arith.constant 0 : index
    %c0_2 = arith.constant 0 : index
    %1 = vector.load %arg2[%c0_1, %c0_2] : memref<1x128xf32, #tpu.memory_space<vmem>>, vector<1x128xf32>
    %2 = vector.broadcast %0 : vector<64x1xf32> to vector<64x128xf32>
    %3 = vector.broadcast %1 : vector<1x128xf32> to vector<64x128xf32>
    %4 = arith.mulf %2, %3 : vector<64x128xf32>
    %c0_3 = arith.constant 0 : index
    %c0_4 = arith.constant 0 : index
    %5 = vector.load %arg3[%c0_3, %c0_4] : memref<1x128xf32, #tpu.memory_space<vmem>>, vector<1x128xf32>
    %6 = vector.broadcast %5 : vector<1x128xf32> to vector<64x128xf32>
    %7 = arith.subf %4, %6 : vector<64x128xf32>
    %8 = math.cos %7 : vector<64x128xf32>
    %c0_5 = arith.constant 0 : index
    %c0_6 = arith.constant 0 : index
    %9 = vector.load %arg4[%c0_5, %c0_6] : memref<64x128xf32, #tpu.memory_space<vmem>>, vector<64x128xf32>
    tpu.vector_store %arg4[%c0_5, %c0_6], %8 {strides = array<i32>} : memref<64x128xf32, #tpu.memory_space<vmem>>, vector<64x128xf32>,
    return
  }
  func.func @transform_0(%arg0: i32) -> (i32, i32) {
    %c0_i32 = arith.constant 0 : i32
    %c0_i32_0 = arith.constant 0 : i32
    return %arg0, %c0_i32 : i32, i32
  }
  func.func @transform_1(%arg0: i32) -> (i32, i32) {
    %c0_i32 = arith.constant 0 : i32
    %c0_i32_0 = arith.constant 0 : i32
    %c0_i32_1 = arith.constant 0 : i32
    return %c0_i32, %c0_i32_0 : i32, i32
  }
  func.func @transform_2(%arg0: i32) -> (i32, i32) {
    %c0_i32 = arith.constant 0 : i32
    %c0_i32_0 = arith.constant 0 : i32
    %c0_i32_1 = arith.constant 0 : i32
    return %c0_i32, %c0_i32_0 : i32, i32
  }
  func.func @transform_3(%arg0: i32) -> (i32, i32) {
    %c0_i32 = arith.constant 0 : i32
    %c0_i32_0 = arith.constant 0 : i32
    return %arg0, %c0_i32 : i32, i32
  }
}

</mosaic_0001>

<llo_original>
// kernel: tpu_custom_call.1
$region0: #{tpu_custom_call.1}
  #allocation0 [shape = 'u32[]', space=smem, size = 0x4, offset = 0x4, fixed_abs, tag = 'smem constant byte address 0x4 - core index']
  #allocation1 [shape = 'u32[72,128]{1,0:T(1,128)}', space=vmem, size = 0x9000, scoped, tag = 'internal scratch']
  %s0 = inlined_call_operand.vmem [shape: f32[200,1], index: 0, kind: input, shape index: {}]
  %s1 = inlined_call_operand.vmem [shape: f32[1,128], index: 1, kind: input, shape index: {}]
  %s2 = inlined_call_operand.vmem [shape: f32[1,128], index: 2, kind: input, shape index: {}]
  %s3 = inlined_call_operand.hbm [shape: f32[200,128], index: 3, kind: output, shape index: {}]
  %s4 = sld [smem:[#allocation0]]
  $region45: #{tpu_custom_call.1} parent=0
    _
  %s6 = ssub.s32 1, %s4
  %s7 = scalar_select 0, %s6, %s4
  $region1: #{tpu_custom_call.1} parent=0
    #allocation2 [shape = 'u8[65536]{0}', space=vmem, size = 0x10000, scoped, tag = 'output window, operand 0']
    #allocation3 [shape = 's32[2]{0}', space=sflag, size = 0x8, scoped, tag = 'scoped memory for tpu_custom_call.1']
    %8 = vsyncpa [#allocation3], 0
    %s9 = scalar_lea.sflag [#allocation3], 1
    %10 = vsyncpa %s9, 0
    loop: start=0, step=1, limit=6
    $region2: #{tpu_custom_call.1} parent=1 // loop_pre_header
      _
    $region3: #{tpu_custom_call.1} parent=1 // loop_header
      %s12 = sphi 0, %s16
      %p13 = scmp.ge.s32.totalorder %s12, 6
      %s22 = sphi 0, %s24
      %s25 = sphi 0, %s22
      %s26 = sphi 0, %s25
      %s42 = sphi 0, %s26
      %s46 = sphi 0, %s46
      %s48 = sphi 0, %s46
      %s49 = sphi 0, %s48
      %s63 = sphi 0, %s49
      %s67 = sphi 0, %s67
      %s69 = sphi 0, %s67
      %s70 = sphi 0, %s69
      %s84 = sphi 0, %s70
      %s90 = sphi 0, %s92
      %s93 = sphi 0, %s90
      %s94 = sphi 0, %s93
      %s110 = sphi 0, %s94
    $region4: #{tpu_custom_call.1} parent=1 // loop_header_branch
      %15 = sbr.rel (%p13) target = $region8
    $region5: #{tpu_custom_call.1} parent=1 // loop_body
      %s17 = ssub.s32 %s12, 1
      %s18 = ssub.s32 %s12, 2
      %s19 = sadd.s32 %s12, 1
      %s20 = ssub.s32 %s12, %s19
      %p21 = scmp.eq.s32.totalorder %s20, 0
      %s23 = sadd.s32 %s22, 1
      %s24 = scalar_select %p21, %s22, %s23
      %p27 = pneg %p21
      %p28 = scmp.eq.s32.totalorder %s12, 3
      %p29 = por %p27, %p28
      %p30 = scmp.ne.s32.totalorder %s22, %s25
      %p31 = scmp.eq.s32.totalorder %s12, 0
      %p32 = por %p30, %p31
      %p33 = scmp.ne.s32.totalorder %s22, %s25
      %p34 = scmp.eq.s32.totalorder %s17, 3
      %p35 = por %p33, %p34
      %p36 = scmp.ne.s32.totalorder %s25, %s26
      %p37 = scmp.eq.s32.totalorder %s17, 0
      %p38 = por %p36, %p37
      %p39 = scmp.ne.s32.totalorder %s25, %s26
      %p40 = scmp.eq.s32.totalorder %s18, 3
      %p41 = por %p39, %p40
      %p43 = scmp.ne.s32.totalorder %s26, %s42
      %p44 = scmp.eq.s32.totalorder %s18, 0
      %p45 = por %p43, %p44
      %s47 = sadd.s32 %s46, 1
      %p50 = scmp.eq.s32.totalorder %s12, 3
      %p51 = scmp.ne.s32.totalorder %s46, %s48
      %p52 = scmp.eq.s32.totalorder %s12, 0
      %p53 = por %p51, %p52
      %p54 = scmp.ne.s32.totalorder %s46, %s48
      %p55 = scmp.eq.s32.totalorder %s17, 3
      %p56 = por %p54, %p55
      %p57 = scmp.ne.s32.totalorder %s48, %s49
      %p58 = scmp.eq.s32.totalorder %s17, 0
      %p59 = por %p57, %p58
      %p60 = scmp.ne.s32.totalorder %s48, %s49
      %p61 = scmp.eq.s32.totalorder %s18, 3
      %p62 = por %p60, %p61
      %p64 = scmp.ne.s32.totalorder %s49, %s63
      %p65 = scmp.eq.s32.totalorder %s18, 0
      %p66 = por %p64, %p65
      %s68 = sadd.s32 %s67, 1
      %p71 = scmp.eq.s32.totalorder %s12, 3
      %p72 = scmp.ne.s32.totalorder %s67, %s69
      %p73 = scmp.eq.s32.totalorder %s12, 0
      %p74 = por %p72, %p73
      %p75 = scmp.ne.s32.totalorder %s67, %s69
      %p76 = scmp.eq.s32.totalorder %s17, 3
      %p77 = por %p75, %p76
      %p78 = scmp.ne.s32.totalorder %s69, %s70
      %p79 = scmp.eq.s32.totalorder %s17, 0
      %p80 = por %p78, %p79
      %p81 = scmp.ne.s32.totalorder %s69, %s70
      %p82 = scmp.eq.s32.totalorder %s18, 3
      %p83 = por %p81, %p82
      %p85 = scmp.ne.s32.totalorder %s70, %s84
      %p86 = scmp.eq.s32.totalorder %s18, 0
      %p87 = por %p85, %p86
      %s88 = ssub.s32 %s12, %s19
      %p89 = scmp.eq.s32.totalorder %s88, 0
      %s91 = sadd.s32 %s90, 1
      %s92 = scalar_select %p89, %s90, %s91
      %p95 = pneg %p89
      %p96 = scmp.eq.s32.totalorder %s12, 3
      %p97 = por %p95, %p96
      %p98 = scmp.ne.s32.totalorder %s90, %s93
      %p99 = scmp.eq.s32.totalorder %s12, 0
      %p100 = por %p98, %p99
      %p101 = scmp.ne.s32.totalorder %s90, %s93
      %p102 = scmp.eq.s32.totalorder %s17, 3
      %p103 = por %p101, %p102
      %p104 = scmp.ne.s32.totalorder %s93, %s94
      %p105 = scmp.eq.s32.totalorder %s17, 0
      %p106 = por %p104, %p105
      %p107 = scmp.ne.s32.totalorder %s93, %s94
      %p108 = scmp.eq.s32.totalorder %s18, 3
      %p109 = por %p107, %p108
      %p111 = scmp.ne.s32.totalorder %s94, %s110
      %p112 = scmp.eq.s32.totalorder %s18, 0
      %p113 = por %p111, %p112
      %p114 = scmp.le.s32.totalorder 1, %s12
      %p115 = scmp.lt.s32.totalorder %s12, 5
      %p116 = pnand %p114, %p115
      %p117 = pneg %p116
      // Predicated region
      $region9: #{tpu_custom_call.1} parent=5 // pred_check
        _
      $region10: #{tpu_custom_call.1} parent=5 // pred_check_branch
        %119 = sbr.rel (%p116) target = $region12
      $region11: #{tpu_custom_call.1} parent=5 // pred_region
        %s120 = ssub.s32 %s12, 1
        // Predicated region
        $region13: #{tpu_custom_call.1} parent=11 // pred_check
          %p121 = pneg %p59
        $region14: #{tpu_custom_call.1} parent=11 // pred_check_branch
          %123 = sbr.rel (%p121) target = $region16
        $region15: #{tpu_custom_call.1} parent=11 // pred_region
          _
        $region16: #{tpu_custom_call.1} parent=11 // pred_fallthru
          _
        // Predicated region
        $region17: #{tpu_custom_call.1} parent=11 // pred_check
          %p124 = pneg %p80
        $region18: #{tpu_custom_call.1} parent=11 // pred_check_branch
          %126 = sbr.rel (%p124) target = $region20
        $region19: #{tpu_custom_call.1} parent=11 // pred_region
          _
        $region20: #{tpu_custom_call.1} parent=11 // pred_fallthru
          _
      $region12: #{tpu_custom_call.1} parent=5 // pred_fallthru
        _
      %p127 = scmp.lt.s32.totalorder %s12, 4
      // Predicated region
      $region21: #{tpu_custom_call.1} parent=5 // pred_check
        %p128 = pneg %p127
      $region22: #{tpu_custom_call.1} parent=5 // pred_check_branch
        %130 = sbr.rel (%p128) target = $region24
      $region23: #{tpu_custom_call.1} parent=5 // pred_region
        // Predicated region
        $region25: #{tpu_custom_call.1} parent=23 // pred_check
          %p131 = pneg %p32
        $region26: #{tpu_custom_call.1} parent=23 // pred_check_branch
          %133 = sbr.rel (%p131) target = $region28
        $region27: #{tpu_custom_call.1} parent=23 // pred_region
          %s134 = smul.u32 8, %s12
          %s135 = ssub.s32 25, %s134
          %p136 = scmp.lt.s32.totalorder %s135, 8
          %s137 = scalar_select %p136, %s135, 8
          %s138 = smul.u32 8, %s137
          %p139 = scmp.lt.s32.totalorder %s134, 24
          %s140 = scalar_select %p139, %s134, 24
          %s141 = smul.addr %s140, 8
          %s142 = scalar_lea.vmem %s0, %s141
          %s143 = smul.u32 8, %s12
          %s144 = ssub.s32 25, %s143
          %p145 = scmp.lt.s32.totalorder %s144, 8
          %s146 = scalar_select %p145, %s144, 8
          %s147 = smul.u32 8, %s146
        $region28: #{tpu_custom_call.1} parent=23 // pred_fallthru
          _
      $region24: #{tpu_custom_call.1} parent=5 // pred_fallthru
        _
      %p148 = scmp.le.s32.totalorder 1, %s12
      %p149 = scmp.lt.s32.totalorder %s12, 5
      %p150 = pnand %p148, %p149
      %p151 = pneg %p150
      // Predicated region
      $region29: #{tpu_custom_call.1} parent=5 // pred_check
        _
      $region30: #{tpu_custom_call.1} parent=5 // pred_check_branch
        %153 = sbr.rel (%p150) target = $region32
      $region31: #{tpu_custom_call.1} parent=5 // pred_region
        %s154 = ssub.s32 %s12, 1
        %s155 = smul.u32 8, %s17
        %s156 = ssub.s32 25, %s155
        %p157 = scmp.lt.s32.totalorder %s156, 8
        %s158 = scalar_select %p157, %s156, 8
        %s159 = smul.u32 8, %s158
        %p160 = scmp.lt.s32.totalorder %s155, 24
        %s161 = scalar_select %p160, %s155, 24
        %s162 = smul.addr %s161, 8
        %s163 = scalar_lea.vmem %s0, %s162
        %p164 = pneg %p38
        %p165 = pneg %p35
        %p166 = pneg %p59
        %p167 = pneg %p56
        %p168 = pneg %p80
        %p169 = pneg %p77
        %p170 = pneg %p106
        %p171 = pneg %p103
        %s172 = sand.u32 %s93, 1
        %s173 = scalar_lea.sflag [#allocation3], %s172
        %s174 = sand.u32 %s93, 1
        %s175 = smul.addr %s174, 64
        %s176 = scalar_lea.vmem [#allocation2], %s175
        %s177 = smul.u32 8, %s17
        %s178 = ssub.s32 25, %s177
        %p179 = scmp.lt.s32.totalorder %s178, 8
        %s180 = scalar_select %p179, %s178, 8
        %s181 = smul.u32 8, %s180
        %p182 = scmp.lt.s32.totalorder %s177, 24
        %s183 = scalar_select %p182, %s177, 24
        %s184 = smul.addr %s183, 8
        %s185 = scalar_lea.vmem %s0, %s184
        %s186 = smul.u32 8, %s17
        %s187 = ssub.s32 25, %s186
        %p188 = scmp.lt.s32.totalorder %s187, 8
        %s189 = scalar_select %p188, %s187, 8
        %s190 = smul.u32 8, %s189
        %s191 = smul.u32 8, %s17
        %s192 = ssub.s32 25, %s191
        %p193 = scmp.lt.s32.totalorder %s192, 8
        %s194 = scalar_select %p193, %s192, 8
        %s195 = smul.u32 8, %s194
        %v196 = vld [vmem:[%s185] sm:$0xff]
        %v197 = vld [vmem:[%s185 + $0x8] sm:$0xff]
        %v198 = vld [vmem:[%s185 + $0x10] sm:$0xff]
        %v199 = vld [vmem:[%s185 + $0x18] sm:$0xff]
        %v200 = vld [vmem:[%s185 + $0x20] sm:$0xff]
        %v201 = vld [vmem:[%s185 + $0x28] sm:$0xff]
        %v202 = vld [vmem:[%s185 + $0x30] sm:$0xff]
        %v203 = vld [vmem:[%s185 + $0x38] sm:$0xff]
        %v204 = vld [vmem:[%s1] sm:$0x1]
        %206 = vset.pattern.permute.xlu0 0
        %207 = vperm.xlu0 %206, %v196
        %v208 = vpop.permute.xlu0 %207
        %211 = vset.pattern.permute.xlu0 0
        %212 = vperm.xlu0 %211, %v197
        %v213 = vpop.permute.xlu0 %212
        %216 = vset.pattern.permute.xlu0 0
        %217 = vperm.xlu0 %216, %v198
        %v218 = vpop.permute.xlu0 %217
        %221 = vset.pattern.permute.xlu0 0
        %222 = vperm.xlu0 %221, %v199
        %v223 = vpop.permute.xlu0 %222
        %226 = vset.pattern.permute.xlu0 0
        %227 = vperm.xlu0 %226, %v200
        %v228 = vpop.permute.xlu0 %227
        %231 = vset.pattern.permute.xlu0 0
        %232 = vperm.xlu0 %231, %v201
        %v233 = vpop.permute.xlu0 %232
        %236 = vset.pattern.permute.xlu0 0
        %237 = vperm.xlu0 %236, %v202
        %v238 = vpop.permute.xlu0 %237
        %241 = vset.pattern.permute.xlu0 0
        %242 = vperm.xlu0 %241, %v203
        %v243 = vpop.permute.xlu0 %242
        %v246 = vperm.slane %v204, 0
        %v248 = vmul.f32 %v208, %v246
        %v249 = vmul.f32 %v213, %v246
        %v250 = vmul.f32 %v218, %v246
        %v251 = vmul.f32 %v223, %v246
        %v252 = vmul.f32 %v228, %v246
        %v253 = vmul.f32 %v233, %v246
        %v254 = vmul.f32 %v238, %v246
        %v255 = vmul.f32 %v243, %v246
        %v256 = vld [vmem:[%s2] sm:$0x1]
        %v258 = vperm.slane %v256, 0
        %v260 = vsub.f32 %v248, %v258
        %v261 = vsub.f32 %v249, %v258
        %v262 = vsub.f32 %v250, %v258
        %v263 = vsub.f32 %v251, %v258
        %v264 = vsub.f32 %v252, %v258
        %v265 = vsub.f32 %v253, %v258
        %v266 = vsub.f32 %v254, %v258
        %v267 = vsub.f32 %v255, %v258
        %v268 = vand.u32 2147483647, %v260
        %vm269 = vcmp.le.f32.partialorder %v268, 0.7853982
        %vm270 = vcmp.lt.s32.totalorder %v260, 0
        %v271 = vand.u32 %v260, 2139095040
        %v272 = vshrl.u32 %v271, 23
        %v273 = vsub.s32 %v272, 127
        %v274 = vand.u32 2147483647, %v260
        %v275 = vand.u32 %v274, 8388607
        %v276 = vor.u32 %v275, 8388608
        %v277 = vsub.s32 0, %v276
        %v278 = vadd.s32 %v273, 1
        %vm279 = vcmp.gt.s32.totalorder %v278, 0
        %v280 = vsel %vm279, %v278, 0
        %v281 = vshrl.u32 %v280, 5
        %v282 = vand.u32 %v280, 31
        %v283 = vsub.s32 32, %v282
        %v284 = vshrl.u32 683565275, %v283
        %v285 = vshll.u32 683565275, %v282
        %v286 = vshrl.u32 2475754826, %v283
        %v287 = vor.u32 %v285, %v286
        %v288 = vshll.u32 2475754826, %v282
        %v289 = vshrl.u32 2131351028, %v283
        %v290 = vor.u32 %v288, %v289
        %v291 = vshll.u32 2131351028, %v282
        %v292 = vshrl.u32 2102212464, %v283
        %v293 = vor.u32 %v291, %v292
        %v294 = vshll.u32 2102212464, %v282
        %v295 = vshrl.u32 920167782, %v283
        %v296 = vor.u32 %v294, %v295
        %v297 = vshll.u32 920167782, %v282
        %v298 = vshrl.u32 1326507024, %v283
        %v299 = vor.u32 %v297, %v298
        %vm300 = vcmp.lt.s32.totalorder %v281, 1
        %vm301 = vcmp.lt.s32.totalorder %v281, 2
        %vm302 = vcmp.lt.s32.totalorder %v281, 3
        %vm303 = vcmp.lt.s32.totalorder %v281, 4
        %v304 = vsel %vm300, %v284, %v287
        %v305 = vsel %vm303, %v293, 2102212464
        %v306 = vsel %vm302, %v290, %v305
        %v307 = vsel %vm301, %v304, %v306
        %v308 = vsel %vm300, %v287, %v290
        %v309 = vsel %vm303, %v296, 920167782
        %v310 = vsel %vm302, %v293, %v309
        %v311 = vsel %vm301, %v308, %v310
        %v312 = vsel %vm300, %v290, %v293
        %v313 = vsel %vm303, %v299, 1326507024
        %v314 = vsel %vm302, %v296, %v313
        %v315 = vsel %vm301, %v312, %v314
        %v316 = vshll.u32 %v276, 8
        %v317 = vand.u32 %v316, 65535
        %v318 = vshrl.u32 %v316, 16
        %v319 = vand.u32 %v315, 65535
        %v320 = vshrl.u32 %v315, 16
        %v321 = vmul.u32 %v317, %v319
        %v322 = vmul.u32 %v317, %v320
        %v323 = vmul.u32 %v318, %v319
        %v324 = vmul.u32 %v318, %v320
        %v325 = vshll.u32 %v322, 16
        %v326 = vshrl.u32 %v322, 16
        %v327 = vshll.u32 %v323, 16
        %v328 = vshrl.u32 %v323, 16
        %vm329 = vc.u32 %v321, %v325
        %v330 = vsel %vm329, 1, 0
        %v331 = vadd.s32 %v321, %v325
        %v332 = vadd.s32 %v324, %v330
        %vm333 = vc.u32 %v331, %v327
        %v334 = vsel %vm333, 1, 0
        %v335 = vadd.s32 %v331, %v327
        %v336 = vadd.s32 %v332, %v334
        %v337 = vadd.s32 %v336, %v326
        %v338 = vadd.s32 %v337, %v328
        %v339 = vand.u32 %v316, 65535
        %v340 = vshrl.u32 %v316, 16
        %v341 = vand.u32 %v311, 65535
        %v342 = vshrl.u32 %v311, 16
        %v343 = vmul.u32 %v339, %v341
        %v344 = vmul.u32 %v339, %v342
        %v345 = vmul.u32 %v340, %v341
        %v346 = vmul.u32 %v340, %v342
        %v347 = vshll.u32 %v344, 16
        %v348 = vshrl.u32 %v344, 16
        %v349 = vshll.u32 %v345, 16
        %v350 = vshrl.u32 %v345, 16
        %vm351 = vc.u32 %v343, %v347
        %v352 = vsel %vm351, 1, 0
        %v353 = vadd.s32 %v343, %v347
        %v354 = vadd.s32 %v346, %v352
        %vm355 = vc.u32 %v353, %v349
        %v356 = vsel %vm355, 1, 0
        %v357 = vadd.s32 %v353, %v349
        %v358 = vadd.s32 %v354, %v356
        %v359 = vadd.s32 %v358, %v348
        %v360 = vadd.s32 %v359, %v350
        %v361 = vmul.u32 %v316, %v307
        %v362 = vadd.s32 %v338, %v357
        %vm363 = vc.u32 %v338, %v357
        %v364 = vadd.s32 %v360, 1
        %v365 = vsel %vm363, %v364, %v360
        %v366 = vadd.s32 %v361, %v365
        %v367 = vadd.s32 %v366, 536870912
        %v368 = vshrl.u32 %v367, 30
        %v369 = vshll.u32 %v368, 30
        %v370 = vsub.s32 %v366, %v369
        %vm371 = vcmp.lt.s32.totalorder %v370, 0
        %v372 = vsub.s32 0, %v370
        %v373 = vsel %vm371, %v372, %v370
        %v374 = vclz %v373
        %v375 = vsub.s32 %v374, 2
        %vm376 = vcmp.gt.s32.totalorder 0, %v375
        %v377 = vsel %vm376, 0, %v375
        %v378 = vsub.s32 32, %v377
        %v379 = vshll.u32 %v370, %v377
        %v380 = vshrl.u32 %v362, %v378
        %v381 = vor.u32 %v379, %v380
        %v382 = vsub.s32 4294967266, %v377
        %v383 = vadd.s32 %v382, 127
        %v384 = vshll.u32 %v383, 23
        %v385 = vor.u32 4788187, %v384
        %v386 = vand.u32 2147483647, %v385
        %v388 = vcvt.s32.f32 %v381
        %v389 = vmul.f32 %v388, %v386
        %v390 = vxor.u32 %v389, 2147483648
        %v391 = vsel %vm270, %v390, %v389
        %v392 = vsub.s32 4, %v368
        %v393 = vsel %vm270, %v392, %v368
        %v394 = vsel %vm269, %v260, %v391
        %v395 = vsel %vm269, 0, %v393
        %v396 = vmul.f32 %v394, %v394
        %v397 = vmul.f32 %v396, -0.001358992
        %v398 = vadd.f32 %v397, 0.041655596
        %v399 = vmul.f32 %v396, %v398
        %v400 = vadd.f32 %v399, -0.4999988
        %v401 = vmul.f32 %v396, %v400
        %v402 = vadd.f32 1.0, %v401
        %v403 = vmul.f32 %v394, %v394
        %v404 = vmul.f32 %v403, -0.00019511016
        %v405 = vadd.f32 %v404, 0.008332121
        %v406 = vmul.f32 %v403, %v405
        %v407 = vadd.f32 %v406, -0.16666654
        %v408 = vmul.f32 %v403, %v407
        %v409 = vadd.f32 %v408, 1.0
        %v410 = vmul.f32 %v409, %v394
        %vm411 = vweird.f32 %v260
        %v412 = vand.u32 %v395, 3
        %vm413 = vcmp.lt.s32.totalorder %v412, 2
        %vm414 = vcmp.eq.s32.totalorder %v412, 0
        %v415 = vxor.u32 %v410, 2147483648
        %v416 = vsel %vm414, %v402, %v415
        %vm417 = vcmp.eq.s32.totalorder %v412, 2
        %v418 = vxor.u32 %v402, 2147483648
        %v419 = vsel %vm417, %v418, %v410
        %v420 = vsel %vm413, %v416, %v419
        %v421 = vsel %vm411, nan, %v420
        %v422 = vand.u32 2147483647, %v261
        %vm423 = vcmp.le.f32.partialorder %v422, 0.7853982
        %vm424 = vcmp.lt.s32.totalorder %v261, 0
        %v425 = vand.u32 %v261, 2139095040
        %v426 = vshrl.u32 %v425, 23
        %v427 = vsub.s32 %v426, 127
        %v428 = vand.u32 2147483647, %v261
        %v429 = vand.u32 %v428, 8388607
        %v430 = vor.u32 %v429, 8388608
        %v431 = vsub.s32 0, %v430
        %v432 = vadd.s32 %v427, 1
        %vm433 = vcmp.gt.s32.totalorder %v432, 0
        %v434 = vsel %vm433, %v432, 0
        %v435 = vshrl.u32 %v434, 5
        %v436 = vand.u32 %v434, 31
        %v437 = vsub.s32 32, %v436
        %v438 = vshrl.u32 683565275, %v437
        %v439 = vshll.u32 683565275, %v436
        %v440 = vshrl.u32 2475754826, %v437
        %v441 = vor.u32 %v439, %v440
        %v442 = vshll.u32 2475754826, %v436
        %v443 = vshrl.u32 2131351028, %v437
        %v444 = vor.u32 %v442, %v443
        %v445 = vshll.u32 2131351028, %v436
        %v446 = vshrl.u32 2102212464, %v437
        %v447 = vor.u32 %v445, %v446
        %v448 = vshll.u32 2102212464, %v436
        %v449 = vshrl.u32 920167782, %v437
        %v450 = vor.u32 %v448, %v449
        %v451 = vshll.u32 920167782, %v436
        %v452 = vshrl.u32 1326507024, %v437
        %v453 = vor.u32 %v451, %v452
        %vm454 = vcmp.lt.s32.totalorder %v435, 1
        %vm455 = vcmp.lt.s32.totalorder %v435, 2
        %vm456 = vcmp.lt.s32.totalorder %v435, 3
        %vm457 = vcmp.lt.s32.totalorder %v435, 4
        %v458 = vsel %vm454, %v438, %v441
        %v459 = vsel %vm457, %v447, 2102212464
        %v460 = vsel %vm456, %v444, %v459
        %v461 = vsel %vm455, %v458, %v460
        %v462 = vsel %vm454, %v441, %v444
        %v463 = vsel %vm457, %v450, 920167782
        %v464 = vsel %vm456, %v447, %v463
        %v465 = vsel %vm455, %v462, %v464
        %v466 = vsel %vm454, %v444, %v447
        %v467 = vsel %vm457, %v453, 1326507024
        %v468 = vsel %vm456, %v450, %v467
        %v469 = vsel %vm455, %v466, %v468
        %v470 = vshll.u32 %v430, 8
        %v471 = vand.u32 %v470, 65535
        %v472 = vshrl.u32 %v470, 16
        %v473 = vand.u32 %v469, 65535
        %v474 = vshrl.u32 %v469, 16
        %v475 = vmul.u32 %v471, %v473
        %v476 = vmul.u32 %v471, %v474
        %v477 = vmul.u32 %v472, %v473
        %v478 = vmul.u32 %v472, %v474
        %v479 = vshll.u32 %v476, 16
        %v480 = vshrl.u32 %v476, 16
        %v481 = vshll.u32 %v477, 16
        %v482 = vshrl.u32 %v477, 16
        %vm483 = vc.u32 %v475, %v479
        %v484 = vsel %vm483, 1, 0
        %v485 = vadd.s32 %v475, %v479
        %v486 = vadd.s32 %v478, %v484
        %vm487 = vc.u32 %v485, %v481
        %v488 = vsel %vm487, 1, 0
        %v489 = vadd.s32 %v485, %v481
        %v490 = vadd.s32 %v486, %v488
        %v491 = vadd.s32 %v490, %v480
        %v492 = vadd.s32 %v491, %v482
        %v493 = vand.u32 %v470, 65535
        %v494 = vshrl.u32 %v470, 16
        %v495 = vand.u32 %v465, 65535
        %v496 = vshrl.u32 %v465, 16
        %v497 = vmul.u32 %v493, %v495
        %v498 = vmul.u32 %v493, %v496
        %v499 = vmul.u32 %v494, %v495
        %v500 = vmul.u32 %v494, %v496
        %v501 = vshll.u32 %v498, 16
        %v502 = vshrl.u32 %v498, 16
        %v503 = vshll.u32 %v499, 16
        %v504 = vshrl.u32 %v499, 16
        %vm505 = vc.u32 %v497, %v501
        %v506 = vsel %vm505, 1, 0
        %v507 = vadd.s32 %v497, %v501
        %v508 = vadd.s32 %v500, %v506
        %vm509 = vc.u32 %v507, %v503
        %v510 = vsel %vm509, 1, 0
        %v511 = vadd.s32 %v507, %v503
        %v512 = vadd.s32 %v508, %v510
        %v513 = vadd.s32 %v512, %v502
        %v514 = vadd.s32 %v513, %v504
        %v515 = vmul.u32 %v470, %v461
        %v516 = vadd.s32 %v492, %v511
        %vm517 = vc.u32 %v492, %v511
        %v518 = vadd.s32 %v514, 1
        %v519 = vsel %vm517, %v518, %v514
        %v520 = vadd.s32 %v515, %v519
        %v521 = vadd.s32 %v520, 536870912
        %v522 = vshrl.u32 %v521, 30
        %v523 = vshll.u32 %v522, 30
        %v524 = vsub.s32 %v520, %v523
        %vm525 = vcmp.lt.s32.totalorder %v524, 0
        %v526 = vsub.s32 0, %v524
        %v527 = vsel %vm525, %v526, %v524
        %v528 = vclz %v527
        %v529 = vsub.s32 %v528, 2
        %vm530 = vcmp.gt.s32.totalorder 0, %v529
        %v531 = vsel %vm530, 0, %v529
        %v532 = vsub.s32 32, %v531
        %v533 = vshll.u32 %v524, %v531
        %v534 = vshrl.u32 %v516, %v532
        %v535 = vor.u32 %v533, %v534
        %v536 = vsub.s32 4294967266, %v531
        %v537 = vadd.s32 %v536, 127
        %v538 = vshll.u32 %v537, 23
        %v539 = vor.u32 4788187, %v538
        %v540 = vand.u32 2147483647, %v539
        %v542 = vcvt.s32.f32 %v535
        %v543 = vmul.f32 %v542, %v540
        %v544 = vxor.u32 %v543, 2147483648
        %v545 = vsel %vm424, %v544, %v543
        %v546 = vsub.s32 4, %v522
        %v547 = vsel %vm424, %v546, %v522
        %v548 = vsel %vm423, %v261, %v545
        %v549 = vsel %vm423, 0, %v547
        %v550 = vmul.f32 %v548, %v548
        %v551 = vmul.f32 %v550, -0.001358992
        %v552 = vadd.f32 %v551, 0.041655596
        %v553 = vmul.f32 %v550, %v552
        %v554 = vadd.f32 %v553, -0.4999988
        %v555 = vmul.f32 %v550, %v554
        %v556 = vadd.f32 1.0, %v555
        %v557 = vmul.f32 %v548, %v548
        %v558 = vmul.f32 %v557, -0.00019511016
        %v559 = vadd.f32 %v558, 0.008332121
        %v560 = vmul.f32 %v557, %v559
        %v561 = vadd.f32 %v560, -0.16666654
        %v562 = vmul.f32 %v557, %v561
        %v563 = vadd.f32 %v562, 1.0
        %v564 = vmul.f32 %v563, %v548
        %vm565 = vweird.f32 %v261
        %v566 = vand.u32 %v549, 3
        %vm567 = vcmp.lt.s32.totalorder %v566, 2
        %vm568 = vcmp.eq.s32.totalorder %v566, 0
        %v569 = vxor.u32 %v564, 2147483648
        %v570 = vsel %vm568, %v556, %v569
        %vm571 = vcmp.eq.s32.totalorder %v566, 2
        %v572 = vxor.u32 %v556, 2147483648
        %v573 = vsel %vm571, %v572, %v564
        %v574 = vsel %vm567, %v570, %v573
        %v575 = vsel %vm565, nan, %v574
        %v576 = vand.u32 2147483647, %v262
        %vm577 = vcmp.le.f32.partialorder %v576, 0.7853982
        %vm578 = vcmp.lt.s32.totalorder %v262, 0
        %v579 = vand.u32 %v262, 2139095040
        %v580 = vshrl.u32 %v579, 23
        %v581 = vsub.s32 %v580, 127
        %v582 = vand.u32 2147483647, %v262
        %v583 = vand.u32 %v582, 8388607
        %v584 = vor.u32 %v583, 8388608
        %v585 = vsub.s32 0, %v584
        %v586 = vadd.s32 %v581, 1
        %vm587 = vcmp.gt.s32.totalorder %v586, 0
        %v588 = vsel %vm587, %v586, 0
        %v589 = vshrl.u32 %v588, 5
        %v590 = vand.u32 %v588, 31
        %v591 = vsub.s32 32, %v590
        %v592 = vshrl.u32 683565275, %v591
        %v593 = vshll.u32 683565275, %v590
        %v594 = vshrl.u32 2475754826, %v591
        %v595 = vor.u32 %v593, %v594
        %v596 = vshll.u32 2475754826, %v590
        %v597 = vshrl.u32 2131351028, %v591
        %v598 = vor.u32 %v596, %v597
        %v599 = vshll.u32 2131351028, %v590
        %v600 = vshrl.u32 2102212464, %v591
        %v601 = vor.u32 %v599, %v600
        %v602 = vshll.u32 2102212464, %v590
        %v603 = vshrl.u32 920167782, %v591
        %v604 = vor.u32 %v602, %v603
        %v605 = vshll.u32 920167782, %v590
        %v606 = vshrl.u32 1326507024, %v591
        %v607 = vor.u32 %v605, %v606
        %vm608 = vcmp.lt.s32.totalorder %v589, 1
        %vm609 = vcmp.lt.s32.totalorder %v589, 2
        %vm610 = vcmp.lt.s32.totalorder %v589, 3
        %vm611 = vcmp.lt.s32.totalorder %v589, 4
        %v612 = vsel %vm608, %v592, %v595
        %v613 = vsel %vm611, %v601, 2102212464
        %v614 = vsel %vm610, %v598, %v613
        %v615 = vsel %vm609, %v612, %v614
        %v616 = vsel %vm608, %v595, %v598
        %v617 = vsel %vm611, %v604, 920167782
        %v618 = vsel %vm610, %v601, %v617
        %v619 = vsel %vm609, %v616, %v618
        %v620 = vsel %vm608, %v598, %v601
        %v621 = vsel %vm611, %v607, 1326507024
        %v622 = vsel %vm610, %v604, %v621
        %v623 = vsel %vm609, %v620, %v622
        %v624 = vshll.u32 %v584, 8
        %v625 = vand.u32 %v624, 65535
        %v626 = vshrl.u32 %v624, 16
        %v627 = vand.u32 %v623, 65535
        %v628 = vshrl.u32 %v623, 16
        %v629 = vmul.u32 %v625, %v627
        %v630 = vmul.u32 %v625, %v628
        %v631 = vmul.u32 %v626, %v627
        %v632 = vmul.u32 %v626, %v628
        %v633 = vshll.u32 %v630, 16
        %v634 = vshrl.u32 %v630, 16
        %v635 = vshll.u32 %v631, 16
        %v636 = vshrl.u32 %v631, 16
        %vm637 = vc.u32 %v629, %v633
        %v638 = vsel %vm637, 1, 0
        %v639 = vadd.s32 %v629, %v633
        %v640 = vadd.s32 %v632, %v638
        %vm641 = vc.u32 %v639, %v635
        %v642 = vsel %vm641, 1, 0
        %v643 = vadd.s32 %v639, %v635
        %v644 = vadd.s32 %v640, %v642
        %v645 = vadd.s32 %v644, %v634
        %v646 = vadd.s32 %v645, %v636
        %v647 = vand.u32 %v624, 65535
        %v648 = vshrl.u32 %v624, 16
        %v649 = vand.u32 %v619, 65535
        %v650 = vshrl.u32 %v619, 16
        %v651 = vmul.u32 %v647, %v649
        %v652 = vmul.u32 %v647, %v650
        %v653 = vmul.u32 %v648, %v649
        %v654 = vmul.u32 %v648, %v650
        %v655 = vshll.u32 %v652, 16
        %v656 = vshrl.u32 %v652, 16
        %v657 = vshll.u32 %v653, 16
        %v658 = vshrl.u32 %v653, 16
        %vm659 = vc.u32 %v651, %v655
        %v660 = vsel %vm659, 1, 0
        %v661 = vadd.s32 %v651, %v655
        %v662 = vadd.s32 %v654, %v660
        %vm663 = vc.u32 %v661, %v657
        %v664 = vsel %vm663, 1, 0
        %v665 = vadd.s32 %v661, %v657
        %v666 = vadd.s32 %v662, %v664
        %v667 = vadd.s32 %v666, %v656
        %v668 = vadd.s32 %v667, %v658
        %v669 = vmul.u32 %v624, %v615
        %v670 = vadd.s32 %v646, %v665
        %vm671 = vc.u32 %v646, %v665
        %v672 = vadd.s32 %v668, 1
        %v673 = vsel %vm671, %v672, %v668
        %v674 = vadd.s32 %v669, %v673
        %v675 = vadd.s32 %v674, 536870912
        %v676 = vshrl.u32 %v675, 30
        %v677 = vshll.u32 %v676, 30
        %v678 = vsub.s32 %v674, %v677
        %vm679 = vcmp.lt.s32.totalorder %v678, 0
        %v680 = vsub.s32 0, %v678
        %v681 = vsel %vm679, %v680, %v678
        %v682 = vclz %v681
        %v683 = vsub.s32 %v682, 2
        %vm684 = vcmp.gt.s32.totalorder 0, %v683
        %v685 = vsel %vm684, 0, %v683
        %v686 = vsub.s32 32, %v685
        %v687 = vshll.u32 %v678, %v685
        %v688 = vshrl.u32 %v670, %v686
        %v689 = vor.u32 %v687, %v688
        %v690 = vsub.s32 4294967266, %v685
        %v691 = vadd.s32 %v690, 127
        %v692 = vshll.u32 %v691, 23
        %v693 = vor.u32 4788187, %v692
        %v694 = vand.u32 2147483647, %v693
        %v696 = vcvt.s32.f32 %v689
        %v697 = vmul.f32 %v696, %v694
        %v698 = vxor.u32 %v697, 2147483648
        %v699 = vsel %vm578, %v698, %v697
        %v700 = vsub.s32 4, %v676
        %v701 = vsel %vm578, %v700, %v676
        %v702 = vsel %vm577, %v262, %v699
        %v703 = vsel %vm577, 0, %v701
        %v704 = vmul.f32 %v702, %v702
        %v705 = vmul.f32 %v704, -0.001358992
        %v706 = vadd.f32 %v705, 0.041655596
        %v707 = vmul.f32 %v704, %v706
        %v708 = vadd.f32 %v707, -0.4999988
        %v709 = vmul.f32 %v704, %v708
        %v710 = vadd.f32 1.0, %v709
        %v711 = vmul.f32 %v702, %v702
        %v712 = vmul.f32 %v711, -0.00019511016
        %v713 = vadd.f32 %v712, 0.008332121
        %v714 = vmul.f32 %v711, %v713
        %v715 = vadd.f32 %v714, -0.16666654
        %v716 = vmul.f32 %v711, %v715
        %v717 = vadd.f32 %v716, 1.0
        %v718 = vmul.f32 %v717, %v702
        %vm719 = vweird.f32 %v262
        %v720 = vand.u32 %v703, 3
        %vm721 = vcmp.lt.s32.totalorder %v720, 2
        %vm722 = vcmp.eq.s32.totalorder %v720, 0
        %v723 = vxor.u32 %v718, 2147483648
        %v724 = vsel %vm722, %v710, %v723
        %vm725 = vcmp.eq.s32.totalorder %v720, 2
        %v726 = vxor.u32 %v710, 2147483648
        %v727 = vsel %vm725, %v726, %v718
        %v728 = vsel %vm721, %v724, %v727
        %v729 = vsel %vm719, nan, %v728
        %v730 = vand.u32 2147483647, %v263
        %vm731 = vcmp.le.f32.partialorder %v730, 0.7853982
        %vm732 = vcmp.lt.s32.totalorder %v263, 0
        %v733 = vand.u32 %v263, 2139095040
        %v734 = vshrl.u32 %v733, 23
        %v735 = vsub.s32 %v734, 127
        %v736 = vand.u32 2147483647, %v263
        %v737 = vand.u32 %v736, 8388607
        %v738 = vor.u32 %v737, 8388608
        %v739 = vsub.s32 0, %v738
        %v740 = vadd.s32 %v735, 1
        %vm741 = vcmp.gt.s32.totalorder %v740, 0
        %v742 = vsel %vm741, %v740, 0
        %v743 = vshrl.u32 %v742, 5
        %v744 = vand.u32 %v742, 31
        %v745 = vsub.s32 32, %v744
        %v746 = vshrl.u32 683565275, %v745
        %v747 = vshll.u32 683565275, %v744
        %v748 = vshrl.u32 2475754826, %v745
        %v749 = vor.u32 %v747, %v748
        %v750 = vshll.u32 2475754826, %v744
        %v751 = vshrl.u32 2131351028, %v745
        %v752 = vor.u32 %v750, %v751
        %v753 = vshll.u32 2131351028, %v744
        %v754 = vshrl.u32 2102212464, %v745
        %v755 = vor.u32 %v753, %v754
        %v756 = vshll.u32 2102212464, %v744
        %v757 = vshrl.u32 920167782, %v745
        %v758 = vor.u32 %v756, %v757
        %v759 = vshll.u32 920167782, %v744
        %v760 = vshrl.u32 1326507024, %v745
        %v761 = vor.u32 %v759, %v760
        %vm762 = vcmp.lt.s32.totalorder %v743, 1
        %vm763 = vcmp.lt.s32.totalorder %v743, 2
        %vm764 = vcmp.lt.s32.totalorder %v743, 3
        %vm765 = vcmp.lt.s32.totalorder %v743, 4
        %v766 = vsel %vm762, %v746, %v749
        %v767 = vsel %vm765, %v755, 2102212464
        %v768 = vsel %vm764, %v752, %v767
        %v769 = vsel %vm763, %v766, %v768
        %v770 = vsel %vm762, %v749, %v752
        %v771 = vsel %vm765, %v758, 920167782
        %v772 = vsel %vm764, %v755, %v771
        %v773 = vsel %vm763, %v770, %v772
        %v774 = vsel %vm762, %v752, %v755
        %v775 = vsel %vm765, %v761, 1326507024
        %v776 = vsel %vm764, %v758, %v775
        %v777 = vsel %vm763, %v774, %v776
        %v778 = vshll.u32 %v738, 8
        %v779 = vand.u32 %v778, 65535
        %v780 = vshrl.u32 %v778, 16
        %v781 = vand.u32 %v777, 65535
        %v782 = vshrl.u32 %v777, 16
        %v783 = vmul.u32 %v779, %v781
        %v784 = vmul.u32 %v779, %v782
        %v785 = vmul.u32 %v780, %v781
        %v786 = vmul.u32 %v780, %v782
        %v787 = vshll.u32 %v784, 16
        %v788 = vshrl.u32 %v784, 16
        %v789 = vshll.u32 %v785, 16
        %v790 = vshrl.u32 %v785, 16
        %vm791 = vc.u32 %v783, %v787
        %v792 = vsel %vm791, 1, 0
        %v793 = vadd.s32 %v783, %v787
        %v794 = vadd.s32 %v786, %v792
        %vm795 = vc.u32 %v793, %v789
        %v796 = vsel %vm795, 1, 0
        %v797 = vadd.s32 %v793, %v789
        %v798 = vadd.s32 %v794, %v796
        %v799 = vadd.s32 %v798, %v788
        %v800 = vadd.s32 %v799, %v790
        %v801 = vand.u32 %v778, 65535
        %v802 = vshrl.u32 %v778, 16
        %v803 = vand.u32 %v773, 65535
        %v804 = vshrl.u32 %v773, 16
        %v805 = vmul.u32 %v801, %v803
        %v806 = vmul.u32 %v801, %v804
        %v807 = vmul.u32 %v802, %v803
        %v808 = vmul.u32 %v802, %v804
        %v809 = vshll.u32 %v806, 16
        %v810 = vshrl.u32 %v806, 16
        %v811 = vshll.u32 %v807, 16
        %v812 = vshrl.u32 %v807, 16
        %vm813 = vc.u32 %v805, %v809
        %v814 = vsel %vm813, 1, 0
        %v815 = vadd.s32 %v805, %v809
        %v816 = vadd.s32 %v808, %v814
        %vm817 = vc.u32 %v815, %v811
        %v818 = vsel %vm817, 1, 0
        %v819 = vadd.s32 %v815, %v811
        %v820 = vadd.s32 %v816, %v818
        %v821 = vadd.s32 %v820, %v810
        %v822 = vadd.s32 %v821, %v812
        %v823 = vmul.u32 %v778, %v769
        %v824 = vadd.s32 %v800, %v819
        %vm825 = vc.u32 %v800, %v819
        %v826 = vadd.s32 %v822, 1
        %v827 = vsel %vm825, %v826, %v822
        %v828 = vadd.s32 %v823, %v827
        %v829 = vadd.s32 %v828, 536870912
        %v830 = vshrl.u32 %v829, 30
        %v831 = vshll.u32 %v830, 30
        %v832 = vsub.s32 %v828, %v831
        %vm833 = vcmp.lt.s32.totalorder %v832, 0
        %v834 = vsub.s32 0, %v832
        %v835 = vsel %vm833, %v834, %v832
        %v836 = vclz %v835
        %v837 = vsub.s32 %v836, 2
        %vm838 = vcmp.gt.s32.totalorder 0, %v837
        %v839 = vsel %vm838, 0, %v837
        %v840 = vsub.s32 32, %v839
        %v841 = vshll.u32 %v832, %v839
        %v842 = vshrl.u32 %v824, %v840
        %v843 = vor.u32 %v841, %v842
        %v844 = vsub.s32 4294967266, %v839
        %v845 = vadd.s32 %v844, 127
        %v846 = vshll.u32 %v845, 23
        %v847 = vor.u32 4788187, %v846
        %v848 = vand.u32 2147483647, %v847
        %v850 = vcvt.s32.f32 %v843
        %v851 = vmul.f32 %v850, %v848
        %v852 = vxor.u32 %v851, 2147483648
        %v853 = vsel %vm732, %v852, %v851
        %v854 = vsub.s32 4, %v830
        %v855 = vsel %vm732, %v854, %v830
        %v856 = vsel %vm731, %v263, %v853
        %v857 = vsel %vm731, 0, %v855
        %v858 = vmul.f32 %v856, %v856
        %v859 = vmul.f32 %v858, -0.001358992
        %v860 = vadd.f32 %v859, 0.041655596
        %v861 = vmul.f32 %v858, %v860
        %v862 = vadd.f32 %v861, -0.4999988
        %v863 = vmul.f32 %v858, %v862
        %v864 = vadd.f32 1.0, %v863
        %v865 = vmul.f32 %v856, %v856
        %v866 = vmul.f32 %v865, -0.00019511016
        %v867 = vadd.f32 %v866, 0.008332121
        %v868 = vmul.f32 %v865, %v867
        %v869 = vadd.f32 %v868, -0.16666654
        %v870 = vmul.f32 %v865, %v869
        %v871 = vadd.f32 %v870, 1.0
        %v872 = vmul.f32 %v871, %v856
        %vm873 = vweird.f32 %v263
        %v874 = vand.u32 %v857, 3
        %vm875 = vcmp.lt.s32.totalorder %v874, 2
        %vm876 = vcmp.eq.s32.totalorder %v874, 0
        %v877 = vxor.u32 %v872, 2147483648
        %v878 = vsel %vm876, %v864, %v877
        %vm879 = vcmp.eq.s32.totalorder %v874, 2
        %v880 = vxor.u32 %v864, 2147483648
        %v881 = vsel %vm879, %v880, %v872
        %v882 = vsel %vm875, %v878, %v881
        %v883 = vsel %vm873, nan, %v882
        %v884 = vand.u32 2147483647, %v264
        %vm885 = vcmp.le.f32.partialorder %v884, 0.7853982
        %vm886 = vcmp.lt.s32.totalorder %v264, 0
        %v887 = vand.u32 %v264, 2139095040
        %v888 = vshrl.u32 %v887, 23
        %v889 = vsub.s32 %v888, 127
        %v890 = vand.u32 2147483647, %v264
        %v891 = vand.u32 %v890, 8388607
        %v892 = vor.u32 %v891, 8388608
        %v893 = vsub.s32 0, %v892
        %v894 = vadd.s32 %v889, 1
        %vm895 = vcmp.gt.s32.totalorder %v894, 0
        %v896 = vsel %vm895, %v894, 0
        %v897 = vshrl.u32 %v896, 5
        %v898 = vand.u32 %v896, 31
        %v899 = vsub.s32 32, %v898
        %v900 = vshrl.u32 683565275, %v899
        %v901 = vshll.u32 683565275, %v898
        %v902 = vshrl.u32 2475754826, %v899
        %v903 = vor.u32 %v901, %v902
        %v904 = vshll.u32 2475754826, %v898
        %v905 = vshrl.u32 2131351028, %v899
        %v906 = vor.u32 %v904, %v905
        %v907 = vshll.u32 2131351028, %v898
        %v908 = vshrl.u32 2102212464, %v899
        %v909 = vor.u32 %v907, %v908
        %v910 = vshll.u32 2102212464, %v898
        %v911 = vshrl.u32 920167782, %v899
        %v912 = vor.u32 %v910, %v911
        %v913 = vshll.u32 920167782, %v898
        %v914 = vshrl.u32 1326507024, %v899
        %v915 = vor.u32 %v913, %v914
        %vm916 = vcmp.lt.s32.totalorder %v897, 1
        %vm917 = vcmp.lt.s32.totalorder %v897, 2
        %vm918 = vcmp.lt.s32.totalorder %v897, 3
        %vm919 = vcmp.lt.s32.totalorder %v897, 4
        %v920 = vsel %vm916, %v900, %v903
        %v921 = vsel %vm919, %v909, 2102212464
        %v922 = vsel %vm918, %v906, %v921
        %v923 = vsel %vm917, %v920, %v922
        %v924 = vsel %vm916, %v903, %v906
        %v925 = vsel %vm919, %v912, 920167782
        %v926 = vsel %vm918, %v909, %v925
        %v927 = vsel %vm917, %v924, %v926
        %v928 = vsel %vm916, %v906, %v909
        %v929 = vsel %vm919, %v915, 1326507024
        %v930 = vsel %vm918, %v912, %v929
        %v931 = vsel %vm917, %v928, %v930
        %v932 = vshll.u32 %v892, 8
        %v933 = vand.u32 %v932, 65535
        %v934 = vshrl.u32 %v932, 16
        %v935 = vand.u32 %v931, 65535
        %v936 = vshrl.u32 %v931, 16
        %v937 = vmul.u32 %v933, %v935
        %v938 = vmul.u32 %v933, %v936
        %v939 = vmul.u32 %v934, %v935
        %v940 = vmul.u32 %v934, %v936
        %v941 = vshll.u32 %v938, 16
        %v942 = vshrl.u32 %v938, 16
        %v943 = vshll.u32 %v939, 16
        %v944 = vshrl.u32 %v939, 16
        %vm945 = vc.u32 %v937, %v941
        %v946 = vsel %vm945, 1, 0
        %v947 = vadd.s32 %v937, %v941
        %v948 = vadd.s32 %v940, %v946
        %vm949 = vc.u32 %v947, %v943
        %v950 = vsel %vm949, 1, 0
        %v951 = vadd.s32 %v947, %v943
        %v952 = vadd.s32 %v948, %v950
        %v953 = vadd.s32 %v952, %v942
        %v954 = vadd.s32 %v953, %v944
        %v955 = vand.u32 %v932, 65535
        %v956 = vshrl.u32 %v932, 16
        %v957 = vand.u32 %v927, 65535
        %v958 = vshrl.u32 %v927, 16
        %v959 = vmul.u32 %v955, %v957
        %v960 = vmul.u32 %v955, %v958
        %v961 = vmul.u32 %v956, %v957
        %v962 = vmul.u32 %v956, %v958
        %v963 = vshll.u32 %v960, 16
        %v964 = vshrl.u32 %v960, 16
        %v965 = vshll.u32 %v961, 16
        %v966 = vshrl.u32 %v961, 16
        %vm967 = vc.u32 %v959, %v963
        %v968 = vsel %vm967, 1, 0
        %v969 = vadd.s32 %v959, %v963
        %v970 = vadd.s32 %v962, %v968
        %vm971 = vc.u32 %v969, %v965
        %v972 = vsel %vm971, 1, 0
        %v973 = vadd.s32 %v969, %v965
        %v974 = vadd.s32 %v970, %v972
        %v975 = vadd.s32 %v974, %v964
        %v976 = vadd.s32 %v975, %v966
        %v977 = vmul.u32 %v932, %v923
        %v978 = vadd.s32 %v954, %v973
        %vm979 = vc.u32 %v954, %v973
        %v980 = vadd.s32 %v976, 1
        %v981 = vsel %vm979, %v980, %v976
        %v982 = vadd.s32 %v977, %v981
        %v983 = vadd.s32 %v982, 536870912
        %v984 = vshrl.u32 %v983, 30
        %v985 = vshll.u32 %v984, 30
        %v986 = vsub.s32 %v982, %v985
        %vm987 = vcmp.lt.s32.totalorder %v986, 0
        %v988 = vsub.s32 0, %v986
        %v989 = vsel %vm987, %v988, %v986
        %v990 = vclz %v989
        %v991 = vsub.s32 %v990, 2
        %vm992 = vcmp.gt.s32.totalorder 0, %v991
        %v993 = vsel %vm992, 0, %v991
        %v994 = vsub.s32 32, %v993
        %v995 = vshll.u32 %v986, %v993
        %v996 = vshrl.u32 %v978, %v994
        %v997 = vor.u32 %v995, %v996
        %v998 = vsub.s32 4294967266, %v993
        %v999 = vadd.s32 %v998, 127
        %v1000 = vshll.u32 %v999, 23
        %v1001 = vor.u32 4788187, %v1000
        %v1002 = vand.u32 2147483647, %v1001
        %v1004 = vcvt.s32.f32 %v997
        %v1005 = vmul.f32 %v1004, %v1002
        %v1006 = vxor.u32 %v1005, 2147483648
        %v1007 = vsel %vm886, %v1006, %v1005
        %v1008 = vsub.s32 4, %v984
        %v1009 = vsel %vm886, %v1008, %v984
        %v1010 = vsel %vm885, %v264, %v1007
        %v1011 = vsel %vm885, 0, %v1009
        %v1012 = vmul.f32 %v1010, %v1010
        %v1013 = vmul.f32 %v1012, -0.001358992
        %v1014 = vadd.f32 %v1013, 0.041655596
        %v1015 = vmul.f32 %v1012, %v1014
        %v1016 = vadd.f32 %v1015, -0.4999988
        %v1017 = vmul.f32 %v1012, %v1016
        %v1018 = vadd.f32 1.0, %v1017
        %v1019 = vmul.f32 %v1010, %v1010
        %v1020 = vmul.f32 %v1019, -0.00019511016
        %v1021 = vadd.f32 %v1020, 0.008332121
        %v1022 = vmul.f32 %v1019, %v1021
        %v1023 = vadd.f32 %v1022, -0.16666654
        %v1024 = vmul.f32 %v1019, %v1023
        %v1025 = vadd.f32 %v1024, 1.0
        %v1026 = vmul.f32 %v1025, %v1010
        %vm1027 = vweird.f32 %v264
        %v1028 = vand.u32 %v1011, 3
        %vm1029 = vcmp.lt.s32.totalorder %v1028, 2
        %vm1030 = vcmp.eq.s32.totalorder %v1028, 0
        %v1031 = vxor.u32 %v1026, 2147483648
        %v1032 = vsel %vm1030, %v1018, %v1031
        %vm1033 = vcmp.eq.s32.totalorder %v1028, 2
        %v1034 = vxor.u32 %v1018, 2147483648
        %v1035 = vsel %vm1033, %v1034, %v1026
        %v1036 = vsel %vm1029, %v1032, %v1035
        %v1037 = vsel %vm1027, nan, %v1036
        %v1038 = vand.u32 2147483647, %v265
        %vm1039 = vcmp.le.f32.partialorder %v1038, 0.7853982
        %vm1040 = vcmp.lt.s32.totalorder %v265, 0
        %v1041 = vand.u32 %v265, 2139095040
        %v1042 = vshrl.u32 %v1041, 23
        %v1043 = vsub.s32 %v1042, 127
        %v1044 = vand.u32 2147483647, %v265
        %v1045 = vand.u32 %v1044, 8388607
        %v1046 = vor.u32 %v1045, 8388608
        %v1047 = vsub.s32 0, %v1046
        %v1048 = vadd.s32 %v1043, 1
        %vm1049 = vcmp.gt.s32.totalorder %v1048, 0
        %v1050 = vsel %vm1049, %v1048, 0
        %v1051 = vshrl.u32 %v1050, 5
        %v1052 = vand.u32 %v1050, 31
        %v1053 = vsub.s32 32, %v1052
        %v1054 = vshrl.u32 683565275, %v1053
        %v1055 = vshll.u32 683565275, %v1052
        %v1056 = vshrl.u32 2475754826, %v1053
        %v1057 = vor.u32 %v1055, %v1056
        %v1058 = vshll.u32 2475754826, %v1052
        %v1059 = vshrl.u32 2131351028, %v1053
        %v1060 = vor.u32 %v1058, %v1059
        %v1061 = vshll.u32 2131351028, %v1052
        %v1062 = vshrl.u32 2102212464, %v1053
        %v1063 = vor.u32 %v1061, %v1062
        %v1064 = vshll.u32 2102212464, %v1052
        %v1065 = vshrl.u32 920167782, %v1053
        %v1066 = vor.u32 %v1064, %v1065
        %v1067 = vshll.u32 920167782, %v1052
        %v1068 = vshrl.u32 1326507024, %v1053
        %v1069 = vor.u32 %v1067, %v1068
        %vm1070 = vcmp.lt.s32.totalorder %v1051, 1
        %vm1071 = vcmp.lt.s32.totalorder %v1051, 2
        %vm1072 = vcmp.lt.s32.totalorder %v1051, 3
        %vm1073 = vcmp.lt.s32.totalorder %v1051, 4
        %v1074 = vsel %vm1070, %v1054, %v1057
        %v1075 = vsel %vm1073, %v1063, 2102212464
        %v1076 = vsel %vm1072, %v1060, %v1075
        %v1077 = vsel %vm1071, %v1074, %v1076
        %v1078 = vsel %vm1070, %v1057, %v1060
        %v1079 = vsel %vm1073, %v1066, 920167782
        %v1080 = vsel %vm1072, %v1063, %v1079
        %v1081 = vsel %vm1071, %v1078, %v1080
        %v1082 = vsel %vm1070, %v1060, %v1063
        %v1083 = vsel %vm1073, %v1069, 1326507024
        %v1084 = vsel %vm1072, %v1066, %v1083
        %v1085 = vsel %vm1071, %v1082, %v1084
        %v1086 = vshll.u32 %v1046, 8
        %v1087 = vand.u32 %v1086, 65535
        %v1088 = vshrl.u32 %v1086, 16
        %v1089 = vand.u32 %v1085, 65535
        %v1090 = vshrl.u32 %v1085, 16
        %v1091 = vmul.u32 %v1087, %v1089
        %v1092 = vmul.u32 %v1087, %v1090
        %v1093 = vmul.u32 %v1088, %v1089
        %v1094 = vmul.u32 %v1088, %v1090
        %v1095 = vshll.u32 %v1092, 16
        %v1096 = vshrl.u32 %v1092, 16
        %v1097 = vshll.u32 %v1093, 16
        %v1098 = vshrl.u32 %v1093, 16
        %vm1099 = vc.u32 %v1091, %v1095
        %v1100 = vsel %vm1099, 1, 0
        %v1101 = vadd.s32 %v1091, %v1095
        %v1102 = vadd.s32 %v1094, %v1100
        %vm1103 = vc.u32 %v1101, %v1097
        %v1104 = vsel %vm1103, 1, 0
        %v1105 = vadd.s32 %v1101, %v1097
        %v1106 = vadd.s32 %v1102, %v1104
        %v1107 = vadd.s32 %v1106, %v1096
        %v1108 = vadd.s32 %v1107, %v1098
        %v1109 = vand.u32 %v1086, 65535
        %v1110 = vshrl.u32 %v1086, 16
        %v1111 = vand.u32 %v1081, 65535
        %v1112 = vshrl.u32 %v1081, 16
        %v1113 = vmul.u32 %v1109, %v1111
        %v1114 = vmul.u32 %v1109, %v1112
        %v1115 = vmul.u32 %v1110, %v1111
        %v1116 = vmul.u32 %v1110, %v1112
        %v1117 = vshll.u32 %v1114, 16
        %v1118 = vshrl.u32 %v1114, 16
        %v1119 = vshll.u32 %v1115, 16
        %v1120 = vshrl.u32 %v1115, 16
        %vm1121 = vc.u32 %v1113, %v1117
        %v1122 = vsel %vm1121, 1, 0
        %v1123 = vadd.s32 %v1113, %v1117
        %v1124 = vadd.s32 %v1116, %v1122
        %vm1125 = vc.u32 %v1123, %v1119
        %v1126 = vsel %vm1125, 1, 0
        %v1127 = vadd.s32 %v1123, %v1119
        %v1128 = vadd.s32 %v1124, %v1126
        %v1129 = vadd.s32 %v1128, %v1118
        %v1130 = vadd.s32 %v1129, %v1120
        %v1131 = vmul.u32 %v1086, %v1077
        %v1132 = vadd.s32 %v1108, %v1127
        %vm1133 = vc.u32 %v1108, %v1127
        %v1134 = vadd.s32 %v1130, 1
        %v1135 = vsel %vm1133, %v1134, %v1130
        %v1136 = vadd.s32 %v1131, %v1135
        %v1137 = vadd.s32 %v1136, 536870912
        %v1138 = vshrl.u32 %v1137, 30
        %v1139 = vshll.u32 %v1138, 30
        %v1140 = vsub.s32 %v1136, %v1139
        %vm1141 = vcmp.lt.s32.totalorder %v1140, 0
        %v1142 = vsub.s32 0, %v1140
        %v1143 = vsel %vm1141, %v1142, %v1140
        %v1144 = vclz %v1143
        %v1145 = vsub.s32 %v1144, 2
        %vm1146 = vcmp.gt.s32.totalorder 0, %v1145
        %v1147 = vsel %vm1146, 0, %v1145
        %v1148 = vsub.s32 32, %v1147
        %v1149 = vshll.u32 %v1140, %v1147
        %v1150 = vshrl.u32 %v1132, %v1148
        %v1151 = vor.u32 %v1149, %v1150
        %v1152 = vsub.s32 4294967266, %v1147
        %v1153 = vadd.s32 %v1152, 127
        %v1154 = vshll.u32 %v1153, 23
        %v1155 = vor.u32 4788187, %v1154
        %v1156 = vand.u32 2147483647, %v1155
        %v1158 = vcvt.s32.f32 %v1151
        %v1159 = vmul.f32 %v1158, %v1156
        %v1160 = vxor.u32 %v1159, 2147483648
        %v1161 = vsel %vm1040, %v1160, %v1159
        %v1162 = vsub.s32 4, %v1138
        %v1163 = vsel %vm1040, %v1162, %v1138
        %v1164 = vsel %vm1039, %v265, %v1161
        %v1165 = vsel %vm1039, 0, %v1163
        %v1166 = vmul.f32 %v1164, %v1164
        %v1167 = vmul.f32 %v1166, -0.001358992
        %v1168 = vadd.f32 %v1167, 0.041655596
        %v1169 = vmul.f32 %v1166, %v1168
        %v1170 = vadd.f32 %v1169, -0.4999988
        %v1171 = vmul.f32 %v1166, %v1170
        %v1172 = vadd.f32 1.0, %v1171
        %v1173 = vmul.f32 %v1164, %v1164
        %v1174 = vmul.f32 %v1173, -0.00019511016
        %v1175 = vadd.f32 %v1174, 0.008332121
        %v1176 = vmul.f32 %v1173, %v1175
        %v1177 = vadd.f32 %v1176, -0.16666654
        %v1178 = vmul.f32 %v1173, %v1177
        %v1179 = vadd.f32 %v1178, 1.0
        %v1180 = vmul.f32 %v1179, %v1164
        %vm1181 = vweird.f32 %v265
        %v1182 = vand.u32 %v1165, 3
        %vm1183 = vcmp.lt.s32.totalorder %v1182, 2
        %vm1184 = vcmp.eq.s32.totalorder %v1182, 0
        %v1185 = vxor.u32 %v1180, 2147483648
        %v1186 = vsel %vm1184, %v1172, %v1185
        %vm1187 = vcmp.eq.s32.totalorder %v1182, 2
        %v1188 = vxor.u32 %v1172, 2147483648
        %v1189 = vsel %vm1187, %v1188, %v1180
        %v1190 = vsel %vm1183, %v1186, %v1189
        %v1191 = vsel %vm1181, nan, %v1190
        %v1192 = vand.u32 2147483647, %v266
        %vm1193 = vcmp.le.f32.partialorder %v1192, 0.7853982
        %vm1194 = vcmp.lt.s32.totalorder %v266, 0
        %v1195 = vand.u32 %v266, 2139095040
        %v1196 = vshrl.u32 %v1195, 23
        %v1197 = vsub.s32 %v1196, 127
        %v1198 = vand.u32 2147483647, %v266
        %v1199 = vand.u32 %v1198, 8388607
        %v1200 = vor.u32 %v1199, 8388608
        %v1201 = vsub.s32 0, %v1200
        %v1202 = vadd.s32 %v1197, 1
        %vm1203 = vcmp.gt.s32.totalorder %v1202, 0
        %v1204 = vsel %vm1203, %v1202, 0
        %v1205 = vshrl.u32 %v1204, 5
        %v1206 = vand.u32 %v1204, 31
        %v1207 = vsub.s32 32, %v1206
        %v1208 = vshrl.u32 683565275, %v1207
        %v1209 = vshll.u32 683565275, %v1206
        %v1210 = vshrl.u32 2475754826, %v1207
        %v1211 = vor.u32 %v1209, %v1210
        %v1212 = vshll.u32 2475754826, %v1206
        %v1213 = vshrl.u32 2131351028, %v1207
        %v1214 = vor.u32 %v1212, %v1213
        %v1215 = vshll.u32 2131351028, %v1206
        %v1216 = vshrl.u32 2102212464, %v1207
        %v1217 = vor.u32 %v1215, %v1216
        %v1218 = vshll.u32 2102212464, %v1206
        %v1219 = vshrl.u32 920167782, %v1207
        %v1220 = vor.u32 %v1218, %v1219
        %v1221 = vshll.u32 920167782, %v1206
        %v1222 = vshrl.u32 1326507024, %v1207
        %v1223 = vor.u32 %v1221, %v1222
        %vm1224 = vcmp.lt.s32.totalorder %v1205, 1
        %vm1225 = vcmp.lt.s32.totalorder %v1205, 2
        %vm1226 = vcmp.lt.s32.totalorder %v1205, 3
        %vm1227 = vcmp.lt.s32.totalorder %v1205, 4
        %v1228 = vsel %vm1224, %v1208, %v1211
        %v1229 = vsel %vm1227, %v1217, 2102212464
        %v1230 = vsel %vm1226, %v1214, %v1229
        %v1231 = vsel %vm1225, %v1228, %v1230
        %v1232 = vsel %vm1224, %v1211, %v1214
        %v1233 = vsel %vm1227, %v1220, 920167782
        %v1234 = vsel %vm1226, %v1217, %v1233
        %v1235 = vsel %vm1225, %v1232, %v1234
        %v1236 = vsel %vm1224, %v1214, %v1217
        %v1237 = vsel %vm1227, %v1223, 1326507024
        %v1238 = vsel %vm1226, %v1220, %v1237
        %v1239 = vsel %vm1225, %v1236, %v1238
        %v1240 = vshll.u32 %v1200, 8
        %v1241 = vand.u32 %v1240, 65535
        %v1242 = vshrl.u32 %v1240, 16
        %v1243 = vand.u32 %v1239, 65535
        %v1244 = vshrl.u32 %v1239, 16
        %v1245 = vmul.u32 %v1241, %v1243
        %v1246 = vmul.u32 %v1241, %v1244
        %v1247 = vmul.u32 %v1242, %v1243
        %v1248 = vmul.u32 %v1242, %v1244
        %v1249 = vshll.u32 %v1246, 16
        %v1250 = vshrl.u32 %v1246, 16
        %v1251 = vshll.u32 %v1247, 16
        %v1252 = vshrl.u32 %v1247, 16
        %vm1253 = vc.u32 %v1245, %v1249
        %v1254 = vsel %vm1253, 1, 0
        %v1255 = vadd.s32 %v1245, %v1249
        %v1256 = vadd.s32 %v1248, %v1254
        %vm1257 = vc.u32 %v1255, %v1251
        %v1258 = vsel %vm1257, 1, 0
        %v1259 = vadd.s32 %v1255, %v1251
        %v1260 = vadd.s32 %v1256, %v1258
        %v1261 = vadd.s32 %v1260, %v1250
        %v1262 = vadd.s32 %v1261, %v1252
        %v1263 = vand.u32 %v1240, 65535
        %v1264 = vshrl.u32 %v1240, 16
        %v1265 = vand.u32 %v1235, 65535
        %v1266 = vshrl.u32 %v1235, 16
        %v1267 = vmul.u32 %v1263, %v1265
        %v1268 = vmul.u32 %v1263, %v1266
        %v1269 = vmul.u32 %v1264, %v1265
        %v1270 = vmul.u32 %v1264, %v1266
        %v1271 = vshll.u32 %v1268, 16
        %v1272 = vshrl.u32 %v1268, 16
        %v1273 = vshll.u32 %v1269, 16
        %v1274 = vshrl.u32 %v1269, 16
        %vm1275 = vc.u32 %v1267, %v1271
        %v1276 = vsel %vm1275, 1, 0
        %v1277 = vadd.s32 %v1267, %v1271
        %v1278 = vadd.s32 %v1270, %v1276
        %vm1279 = vc.u32 %v1277, %v1273
        %v1280 = vsel %vm1279, 1, 0
        %v1281 = vadd.s32 %v1277, %v1273
        %v1282 = vadd.s32 %v1278, %v1280
        %v1283 = vadd.s32 %v1282, %v1272
        %v1284 = vadd.s32 %v1283, %v1274
        %v1285 = vmul.u32 %v1240, %v1231
        %v1286 = vadd.s32 %v1262, %v1281
        %vm1287 = vc.u32 %v1262, %v1281
        %v1288 = vadd.s32 %v1284, 1
        %v1289 = vsel %vm1287, %v1288, %v1284
        %v1290 = vadd.s32 %v1285, %v1289
        %v1291 = vadd.s32 %v1290, 536870912
        %v1292 = vshrl.u32 %v1291, 30
        %v1293 = vshll.u32 %v1292, 30
        %v1294 = vsub.s32 %v1290, %v1293
        %vm1295 = vcmp.lt.s32.totalorder %v1294, 0
        %v1296 = vsub.s32 0, %v1294
        %v1297 = vsel %vm1295, %v1296, %v1294
        %v1298 = vclz %v1297
        %v1299 = vsub.s32 %v1298, 2
        %vm1300 = vcmp.gt.s32.totalorder 0, %v1299
        %v1301 = vsel %vm1300, 0, %v1299
        %v1302 = vsub.s32 32, %v1301
        %v1303 = vshll.u32 %v1294, %v1301
        %v1304 = vshrl.u32 %v1286, %v1302
        %v1305 = vor.u32 %v1303, %v1304
        %v1306 = vsub.s32 4294967266, %v1301
        %v1307 = vadd.s32 %v1306, 127
        %v1308 = vshll.u32 %v1307, 23
        %v1309 = vor.u32 4788187, %v1308
        %v1310 = vand.u32 2147483647, %v1309
        %v1312 = vcvt.s32.f32 %v1305
        %v1313 = vmul.f32 %v1312, %v1310
        %v1314 = vxor.u32 %v1313, 2147483648
        %v1315 = vsel %vm1194, %v1314, %v1313
        %v1316 = vsub.s32 4, %v1292
        %v1317 = vsel %vm1194, %v1316, %v1292
        %v1318 = vsel %vm1193, %v266, %v1315
        %v1319 = vsel %vm1193, 0, %v1317
        %v1320 = vmul.f32 %v1318, %v1318
        %v1321 = vmul.f32 %v1320, -0.001358992
        %v1322 = vadd.f32 %v1321, 0.041655596
        %v1323 = vmul.f32 %v1320, %v1322
        %v1324 = vadd.f32 %v1323, -0.4999988
        %v1325 = vmul.f32 %v1320, %v1324
        %v1326 = vadd.f32 1.0, %v1325
        %v1327 = vmul.f32 %v1318, %v1318
        %v1328 = vmul.f32 %v1327, -0.00019511016
        %v1329 = vadd.f32 %v1328, 0.008332121
        %v1330 = vmul.f32 %v1327, %v1329
        %v1331 = vadd.f32 %v1330, -0.16666654
        %v1332 = vmul.f32 %v1327, %v1331
        %v1333 = vadd.f32 %v1332, 1.0
        %v1334 = vmul.f32 %v1333, %v1318
        %vm1335 = vweird.f32 %v266
        %v1336 = vand.u32 %v1319, 3
        %vm1337 = vcmp.lt.s32.totalorder %v1336, 2
        %vm1338 = vcmp.eq.s32.totalorder %v1336, 0
        %v1339 = vxor.u32 %v1334, 2147483648
        %v1340 = vsel %vm1338, %v1326, %v1339
        %vm1341 = vcmp.eq.s32.totalorder %v1336, 2
        %v1342 = vxor.u32 %v1326, 2147483648
        %v1343 = vsel %vm1341, %v1342, %v1334
        %v1344 = vsel %vm1337, %v1340, %v1343
        %v1345 = vsel %vm1335, nan, %v1344
        %v1346 = vand.u32 2147483647, %v267
        %vm1347 = vcmp.le.f32.partialorder %v1346, 0.7853982
        %vm1348 = vcmp.lt.s32.totalorder %v267, 0
        %v1349 = vand.u32 %v267, 2139095040
        %v1350 = vshrl.u32 %v1349, 23
        %v1351 = vsub.s32 %v1350, 127
        %v1352 = vand.u32 2147483647, %v267
        %v1353 = vand.u32 %v1352, 8388607
        %v1354 = vor.u32 %v1353, 8388608
        %v1355 = vsub.s32 0, %v1354
        %v1356 = vadd.s32 %v1351, 1
        %vm1357 = vcmp.gt.s32.totalorder %v1356, 0
        %v1358 = vsel %vm1357, %v1356, 0
        %v1359 = vshrl.u32 %v1358, 5
        %v1360 = vand.u32 %v1358, 31
        %v1361 = vsub.s32 32, %v1360
        %v1362 = vshrl.u32 683565275, %v1361
        %v1363 = vshll.u32 683565275, %v1360
        %v1364 = vshrl.u32 2475754826, %v1361
        %v1365 = vor.u32 %v1363, %v1364
        %v1366 = vshll.u32 2475754826, %v1360
        %v1367 = vshrl.u32 2131351028, %v1361
        %v1368 = vor.u32 %v1366, %v1367
        %v1369 = vshll.u32 2131351028, %v1360
        %v1370 = vshrl.u32 2102212464, %v1361
        %v1371 = vor.u32 %v1369, %v1370
        %v1372 = vshll.u32 2102212464, %v1360
        %v1373 = vshrl.u32 920167782, %v1361
        %v1374 = vor.u32 %v1372, %v1373
        %v1375 = vshll.u32 920167782, %v1360
        %v1376 = vshrl.u32 1326507024, %v1361
        %v1377 = vor.u32 %v1375, %v1376
        %vm1378 = vcmp.lt.s32.totalorder %v1359, 1
        %vm1379 = vcmp.lt.s32.totalorder %v1359, 2
        %vm1380 = vcmp.lt.s32.totalorder %v1359, 3
        %vm1381 = vcmp.lt.s32.totalorder %v1359, 4
        %v1382 = vsel %vm1378, %v1362, %v1365
        %v1383 = vsel %vm1381, %v1371, 2102212464
        %v1384 = vsel %vm1380, %v1368, %v1383
        %v1385 = vsel %vm1379, %v1382, %v1384
        %v1386 = vsel %vm1378, %v1365, %v1368
        %v1387 = vsel %vm1381, %v1374, 920167782
        %v1388 = vsel %vm1380, %v1371, %v1387
        %v1389 = vsel %vm1379, %v1386, %v1388
        %v1390 = vsel %vm1378, %v1368, %v1371
        %v1391 = vsel %vm1381, %v1377, 1326507024
        %v1392 = vsel %vm1380, %v1374, %v1391
        %v1393 = vsel %vm1379, %v1390, %v1392
        %v1394 = vshll.u32 %v1354, 8
        %v1395 = vand.u32 %v1394, 65535
        %v1396 = vshrl.u32 %v1394, 16
        %v1397 = vand.u32 %v1393, 65535
        %v1398 = vshrl.u32 %v1393, 16
        %v1399 = vmul.u32 %v1395, %v1397
        %v1400 = vmul.u32 %v1395, %v1398
        %v1401 = vmul.u32 %v1396, %v1397
        %v1402 = vmul.u32 %v1396, %v1398
        %v1403 = vshll.u32 %v1400, 16
        %v1404 = vshrl.u32 %v1400, 16
        %v1405 = vshll.u32 %v1401, 16
        %v1406 = vshrl.u32 %v1401, 16
        %vm1407 = vc.u32 %v1399, %v1403
        %v1408 = vsel %vm1407, 1, 0
        %v1409 = vadd.s32 %v1399, %v1403
        %v1410 = vadd.s32 %v1402, %v1408
        %vm1411 = vc.u32 %v1409, %v1405
        %v1412 = vsel %vm1411, 1, 0
        %v1413 = vadd.s32 %v1409, %v1405
        %v1414 = vadd.s32 %v1410, %v1412
        %v1415 = vadd.s32 %v1414, %v1404
        %v1416 = vadd.s32 %v1415, %v1406
        %v1417 = vand.u32 %v1394, 65535
        %v1418 = vshrl.u32 %v1394, 16
        %v1419 = vand.u32 %v1389, 65535
        %v1420 = vshrl.u32 %v1389, 16
        %v1421 = vmul.u32 %v1417, %v1419
        %v1422 = vmul.u32 %v1417, %v1420
        %v1423 = vmul.u32 %v1418, %v1419
        %v1424 = vmul.u32 %v1418, %v1420
        %v1425 = vshll.u32 %v1422, 16
        %v1426 = vshrl.u32 %v1422, 16
        %v1427 = vshll.u32 %v1423, 16
        %v1428 = vshrl.u32 %v1423, 16
        %vm1429 = vc.u32 %v1421, %v1425
        %v1430 = vsel %vm1429, 1, 0
        %v1431 = vadd.s32 %v1421, %v1425
        %v1432 = vadd.s32 %v1424, %v1430
        %vm1433 = vc.u32 %v1431, %v1427
        %v1434 = vsel %vm1433, 1, 0
        %v1435 = vadd.s32 %v1431, %v1427
        %v1436 = vadd.s32 %v1432, %v1434
        %v1437 = vadd.s32 %v1436, %v1426
        %v1438 = vadd.s32 %v1437, %v1428
        %v1439 = vmul.u32 %v1394, %v1385
        %v1440 = vadd.s32 %v1416, %v1435
        %vm1441 = vc.u32 %v1416, %v1435
        %v1442 = vadd.s32 %v1438, 1
        %v1443 = vsel %vm1441, %v1442, %v1438
        %v1444 = vadd.s32 %v1439, %v1443
        %v1445 = vadd.s32 %v1444, 536870912
        %v1446 = vshrl.u32 %v1445, 30
        %v1447 = vshll.u32 %v1446, 30
        %v1448 = vsub.s32 %v1444, %v1447
        %vm1449 = vcmp.lt.s32.totalorder %v1448, 0
        %v1450 = vsub.s32 0, %v1448
        %v1451 = vsel %vm1449, %v1450, %v1448
        %v1452 = vclz %v1451
        %v1453 = vsub.s32 %v1452, 2
        %vm1454 = vcmp.gt.s32.totalorder 0, %v1453
        %v1455 = vsel %vm1454, 0, %v1453
        %v1456 = vsub.s32 32, %v1455
        %v1457 = vshll.u32 %v1448, %v1455
        %v1458 = vshrl.u32 %v1440, %v1456
        %v1459 = vor.u32 %v1457, %v1458
        %v1460 = vsub.s32 4294967266, %v1455
        %v1461 = vadd.s32 %v1460, 127
        %v1462 = vshll.u32 %v1461, 23
        %v1463 = vor.u32 4788187, %v1462
        %v1464 = vand.u32 2147483647, %v1463
        %v1466 = vcvt.s32.f32 %v1459
        %v1467 = vmul.f32 %v1466, %v1464
        %v1468 = vxor.u32 %v1467, 2147483648
        %v1469 = vsel %vm1348, %v1468, %v1467
        %v1470 = vsub.s32 4, %v1446
        %v1471 = vsel %vm1348, %v1470, %v1446
        %v1472 = vsel %vm1347, %v267, %v1469
        %v1473 = vsel %vm1347, 0, %v1471
        %v1474 = vmul.f32 %v1472, %v1472
        %v1475 = vmul.f32 %v1474, -0.001358992
        %v1476 = vadd.f32 %v1475, 0.041655596
        %v1477 = vmul.f32 %v1474, %v1476
        %v1478 = vadd.f32 %v1477, -0.4999988
        %v1479 = vmul.f32 %v1474, %v1478
        %v1480 = vadd.f32 1.0, %v1479
        %v1481 = vmul.f32 %v1472, %v1472
        %v1482 = vmul.f32 %v1481, -0.00019511016
        %v1483 = vadd.f32 %v1482, 0.008332121
        %v1484 = vmul.f32 %v1481, %v1483
        %v1485 = vadd.f32 %v1484, -0.16666654
        %v1486 = vmul.f32 %v1481, %v1485
        %v1487 = vadd.f32 %v1486, 1.0
        %v1488 = vmul.f32 %v1487, %v1472
        %vm1489 = vweird.f32 %v267
        %v1490 = vand.u32 %v1473, 3
        %vm1491 = vcmp.lt.s32.totalorder %v1490, 2
        %vm1492 = vcmp.eq.s32.totalorder %v1490, 0
        %v1493 = vxor.u32 %v1488, 2147483648
        %v1494 = vsel %vm1492, %v1480, %v1493
        %vm1495 = vcmp.eq.s32.totalorder %v1490, 2
        %v1496 = vxor.u32 %v1480, 2147483648
        %v1497 = vsel %vm1495, %v1496, %v1488
        %v1498 = vsel %vm1491, %v1494, %v1497
        %v1499 = vsel %vm1489, nan, %v1498
        %1500 = vst [vmem:[%s176] sm:$0xff] %v421
        %1501 = vst [vmem:[%s176 + $0x8] sm:$0xff] %v575
        %1502 = vst [vmem:[%s176 + $0x10] sm:$0xff] %v729
        %1503 = vst [vmem:[%s176 + $0x18] sm:$0xff] %v883
        %1504 = vst [vmem:[%s176 + $0x20] sm:$0xff] %v1037
        %1505 = vst [vmem:[%s176 + $0x28] sm:$0xff] %v1191
        %1506 = vst [vmem:[%s176 + $0x30] sm:$0xff] %v1345
        %1507 = vst [vmem:[%s176 + $0x38] sm:$0xff] %v1499
        %s1508 = sand.u32 %s93, 1
        %s1509 = scalar_lea.sflag [#allocation3], %s1508
        %s1510 = sand.u32 %s93, 1
        %s1511 = smul.addr %s1510, 64
        %s1512 = scalar_lea.vmem [#allocation2], %s1511
        // Predicated region
        $region33: #{tpu_custom_call.1} parent=31 // pred_check
          %p1513 = pneg %p103
        $region34: #{tpu_custom_call.1} parent=31 // pred_check_branch
          %1515 = sbr.rel (%p1513) target = $region36
        $region35: #{tpu_custom_call.1} parent=31 // pred_region
          %s1516 = smul.u32 8, %s17
          %s1517 = ssub.s32 25, %s1516
          %p1518 = scmp.lt.s32.totalorder %s1517, 8
          %s1519 = scalar_select %p1518, %s1517, 8
          %s1520 = smul.u32 8, %s1519
          %s1521 = ssub.s32 64, %s1520
          %s1522 = sshll.u32 %s1521, 4
          %1523 = vsyncadd %s1509, %s1522
          %p1524 = scmp.ne.s32.totalorder 0, %s1520
          %s1525 = smul.addr %s1516, 8
          %s1526 = scalar_lea.hbm %s3, %s1525
          %s1527 = smul.u32 8, %s1519
          %s1528 = sshll.u32 %s1512, 4
          %s1529 = int_to_ptr.vmem [resolvable:$true] %s1528
          %s1530 = sshll.u32 %s1526, 4
          %s1531 = int_to_ptr.hbm [resolvable:$true] %s1530
          %s1532 = sshll.u32 %s1527, 4
          %1536 = dma.vmem_to_hbm [thread:$0]  (%p1524), %s1529, %s1532, %s1531, %s1509, 128, 128, 8
        $region36: #{tpu_custom_call.1} parent=31 // pred_fallthru
          _
      $region32: #{tpu_custom_call.1} parent=5 // pred_fallthru
        _
      %p1537 = scmp.le.s32.totalorder 2, %s12
      // Predicated region
      $region37: #{tpu_custom_call.1} parent=5 // pred_check
        %p1538 = pneg %p1537
      $region38: #{tpu_custom_call.1} parent=5 // pred_check_branch
        %1540 = sbr.rel (%p1538) target = $region40
      $region39: #{tpu_custom_call.1} parent=5 // pred_region
        %s1541 = ssub.s32 %s12, 2
        // Predicated region
        $region41: #{tpu_custom_call.1} parent=39 // pred_check
          %p1542 = pneg %p109
        $region42: #{tpu_custom_call.1} parent=39 // pred_check_branch
          %1544 = sbr.rel (%p1542) target = $region44
        $region43: #{tpu_custom_call.1} parent=39 // pred_region
          %s1545 = sand.u32 %s94, 1
          %s1546 = scalar_lea.sflag [#allocation3], %s1545
          %s1547 = sand.u32 %s94, 1
          %s1548 = smul.addr %s1547, 64
          %s1549 = scalar_lea.vmem [#allocation2], %s1548
          %1551 = dma.done %s1546, 1024
        $region44: #{tpu_custom_call.1} parent=39 // pred_fallthru
          _
      $region40: #{tpu_custom_call.1} parent=5 // pred_fallthru
        _
    $region6: #{tpu_custom_call.1} parent=1 // loop_footer
      %s16 = sadd.s32 1, %s12
    $region7: #{tpu_custom_call.1} parent=1 // loop_footer_branch
      %11 = sbr.rel target = $region3
    $region8: #{tpu_custom_call.1} parent=1 // loop_exit
      _
    %1552 = vsyncpa [#allocation3], 1
    %s1553 = scalar_lea.sflag [#allocation3], 1
    %1554 = vsyncpa %s1553, 1

</llo_original>
